<compile_context>
chip_gen: v5e
topology: v5e:2x2
jax: 0.10.0
libtpu: 0.0.40
codegen_flags: <defaults>
</compile_context>

<pallas_src>
import math

import jax
import jax.numpy as jnp
from jax.experimental import pallas as pl
from jax.experimental.pallas import tpu as pltpu

HIDDEN = 256
GRIDLESS_MAX = 1024      # largest batch handled in one shot, fully VMEM-resident
TARGET_TILE = 2048       # target rows per grid step (amortizes ~0.35 us/step)


def _round_up(n, m):
    return ((n + m - 1) // m) * m


def _cdiv(a, b):
    return -(-a // b)


# --------------------------------------------------------------------------
# Kernel: fused 3-layer MLP on one (rows, num_inputs) slab of f32 inputs.
# Casts activations to bf16 for the MXU (f32 accumulation); bias-add / ReLU
# in f32.  Only the real out_dim columns are produced/stored.
# --------------------------------------------------------------------------
def _mlp_kernel(x_ref, w1_ref, b1_ref, w2_ref, b2_ref, w3_ref, b3_ref, o_ref):
    x = x_ref[...].astype(jnp.bfloat16)                               # (rows, in)
    h1 = jnp.dot(x, w1_ref[...], preferred_element_type=jnp.float32) + b1_ref[...]
    h1 = jnp.maximum(h1, 0.0).astype(jnp.bfloat16)
    h2 = jnp.dot(h1, w2_ref[...], preferred_element_type=jnp.float32) + b2_ref[...]
    h2 = jnp.maximum(h2, 0.0).astype(jnp.bfloat16)
    out = jnp.dot(h2, w3_ref[...], preferred_element_type=jnp.float32) + b3_ref[...]
    o_ref[...] = out.astype(o_ref.dtype)


def _choose_tiling(B):
    """Return (b_pad, tile_b, n_tiles); n_tiles is None for the gridless path."""
    if B <= GRIDLESS_MAX:
        return B, B, None
    n_tiles = _cdiv(B, TARGET_TILE)
    if n_tiles % 2:                      # even tile count -> both v7x TCs busy
        n_tiles += 1
    tile_b = _round_up(_cdiv(B, n_tiles), 16)
    return tile_b * n_tiles, tile_b, n_tiles


# --------------------------------------------------------------------------
# Wrapper: dispatches either the gridless resident kernel (small/medium batch,
# zero wrapper-side data movement) or an adaptive batch-tiled grid with the
# weights held at a constant block index (resident across the grid).
# --------------------------------------------------------------------------
def divergence_predict(x, params):
    """x: (B, num_inputs) float32 -> (B, out_dim) float32."""
    w1, b1, w2, b2, w3, b3 = params                   # unpadded; weights bf16
    B, in_dim = x.shape
    hid = w1.shape[1]
    out_dim = w3.shape[1]

    b_pad, tile_b, n_tiles = _choose_tiling(B)

    flops = 2 * b_pad * (in_dim * hid + hid * hid + hid * out_dim)
    bytes_accessed = int(
        b_pad * in_dim * 4
        + (w1.size + w2.size + w3.size) * 2
        + (b1.size + b2.size + b3.size) * 4
        + b_pad * out_dim * 4)
    cost = pl.CostEstimate(flops=flops, transcendentals=0,
                           bytes_accessed=bytes_accessed)

    if n_tiles is None:
        # Single shot: no grid, no pipelining, every operand resident in VMEM,
        # no wrapper-side pad/cast (fused into the kernel).
        # TODO(synk): at very small B this path is launch/DMA dominated; keeping
        # the ~160 KiB of weights resident across calls is a caller-level change.
        vmem = pl.BlockSpec(memory_space=pltpu.MemorySpace.VMEM)
        out = pl.pallas_call(
            _mlp_kernel,
            out_shape=jax.ShapeDtypeStruct((B, out_dim), jnp.float32),
            in_specs=[vmem] * 7,
            out_specs=vmem,
            cost_estimate=cost,
        )(x, w1, b1, w2, b2, w3, b3)
        return out

    # Batched: grid over batch tiles; weights/biases keep a constant block
    # index (stay resident in VMEM across the whole grid).  Only the rows are
    # padded (adaptive tile_b keeps the waste small); features stay unpadded.
    xp = jnp.pad(x, ((0, b_pad - B), (0, 0))) if b_pad != B else x

    def const_spec(shape):
        return pl.BlockSpec(shape, lambda i: (0,) * len(shape))

    out = pl.pallas_call(
        _mlp_kernel,
        out_shape=jax.ShapeDtypeStruct((b_pad, out_dim), jnp.float32),
        grid=(n_tiles,),
        in_specs=[
            pl.BlockSpec((tile_b, in_dim), lambda i: (i, 0)),
            const_spec(w1.shape), const_spec(b1.shape),
            const_spec(w2.shape), const_spec(b2.shape),
            const_spec(w3.shape), const_spec(b3.shape),
        ],
        out_specs=pl.BlockSpec((tile_b, out_dim), lambda i: (i, 0)),
        compiler_params=pltpu.CompilerParams(
            dimension_semantics=("parallel",),
            vmem_limit_bytes=32 * 1024 * 1024),
        cost_estimate=cost,
    )(xp, w1, b1, w2, b2, w3, b3)
    return out[:B] if b_pad != B else out


# --------------------------------------------------------------------------
# Parameter init matching MLPBase.__init__: orthogonal weights, gain sqrt(2),
# zero biases.  Weights are generated in torch layout (out, in), transposed to
# (in, out), and cast to bf16 once here.  No padding anywhere.
# --------------------------------------------------------------------------
def init_params(key, num_inputs, hidden, num_outputs):
    ortho = jax.nn.initializers.orthogonal(scale=math.sqrt(2.0))
    k1, k2, k3 = jax.random.split(key, 3)
    w1 = ortho(k1, (hidden, num_inputs), jnp.float32).T.astype(jnp.bfloat16)
    w2 = ortho(k2, (hidden, hidden), jnp.float32).T.astype(jnp.bfloat16)
    w3 = ortho(k3, (num_outputs, hidden), jnp.float32).T.astype(jnp.bfloat16)
    b1 = jnp.zeros((1, hidden), jnp.float32)
    b2 = jnp.zeros((1, hidden), jnp.float32)
    b3 = jnp.zeros((1, num_outputs), jnp.float32)
    return (w1, b1, w2, b2, w3, b3)


def _reference(x, params):
    """Plain-JAX reference mirroring the kernel's bf16/f32 mixed precision."""
    w1, b1, w2, b2, w3, b3 = params
    f = lambda a: a.astype(jnp.float32)
    xb = f(x.astype(jnp.bfloat16))
    h1 = jnp.maximum(xb @ f(w1) + b1, 0.0).astype(jnp.bfloat16)
    h2 = jnp.maximum(f(h1) @ f(w2) + b2, 0.0).astype(jnp.bfloat16)
    return f(h2) @ f(w3) + b3


# TODO(synk): Divergence.forward raises NotImplementedError and
# Divergence.linear_dynamics builds a per-step Jacobian via torch.autograd.grad;
# the JAX equivalent is jax.jacrev over divergence_predict (an autodiff
# transform, not a Pallas kernel), so neither is implemented as a kernel here.


if __name__ == "__main__":
    # Module-consistent small shapes:
    #   obs_shape = (16,) -> obs_size = 16
    #   action_space = Box(shape=(8,)) -> action_size = 8
    #   num_inputs = 8 + 2*16 = 40, hidden = 256, num_outputs = 16
    obs_size = 16
    action_size = 8
    num_inputs = action_size + 2 * obs_size       # 40
    hidden = HIDDEN
    num_outputs = obs_size                        # 16

    key = jax.random.PRNGKey(0)
    k_params, k_x1, k_x2 = jax.random.split(key, 3)
    params = init_params(k_params, num_inputs, hidden, num_outputs)

    # Small batch -> gridless, everything resident in VMEM, no wrapper ops.
    x_small = jax.random.normal(k_x1, (8, num_inputs), dtype=jnp.float32)
    out_small = jax.block_until_ready(divergence_predict(x_small, params))
    assert out_small.shape == (8, num_outputs)
    assert jnp.allclose(out_small, _reference(x_small, params),
                        atol=2e-2, rtol=2e-2)

    # Larger batch -> adaptive batch-tiled grid (2 even tiles of 1264 rows,
    # parallel axis -> sharded across v7x's 2 TensorCores), weights resident.
    x_big = jax.random.normal(k_x2, (2500, num_inputs), dtype=jnp.float32)
    out_big = jax.block_until_ready(divergence_predict(x_big, params))
    assert out_big.shape == (2500, num_outputs)
    assert jnp.allclose(out_big, _reference(x_big, params),
                        atol=2e-2, rtol=2e-2)

    print("KERNEL_OK")
</pallas_src>

<mosaic_0001>
module attributes {stable_mosaic.version = 11 : i64} {
  func.func @_mlp_kernel(%arg0: memref<8x40xf32, #tpu.memory_space<vmem>>, %arg1: memref<40x256xbf16, #tpu.memory_space<vmem>>, %arg2: memref<1x256xf32, #tpu.memory_space<vmem>>, %arg3: memref<256x256xbf16, #tpu.memory_space<vmem>>, %arg4: memref<1x256xf32, #tpu.memory_space<vmem>>, %arg5: memref<256x16xbf16, #tpu.memory_space<vmem>>, %arg6: memref<1x16xf32, #tpu.memory_space<vmem>>, %arg7: memref<8x16xf32, #tpu.memory_space<vmem>>) attributes {dimension_semantics = [], scalar_prefetch = 0 : i64, scratch_operands = 0 : i64, tpu.core_type = #tpu.core_type<tc>} {
    %c0 = arith.constant 0 : index
    %c0_0 = arith.constant 0 : index
    %0 = vector.load %arg0[%c0, %c0_0] : memref<8x40xf32, #tpu.memory_space<vmem>>, vector<8x40xf32>
    %1 = arith.truncf %0 : vector<8x40xf32> to vector<8x40xbf16>
    %c0_1 = arith.constant 0 : index
    %c0_2 = arith.constant 0 : index
    %2 = vector.load %arg1[%c0_1, %c0_2] : memref<40x256xbf16, #tpu.memory_space<vmem>>, vector<40x256xbf16>
    %cst = arith.constant dense<0.000000e+00> : vector<8x256xf32>
    %3 = tpu.matmul %1, %2, %cst {dimension_numbers = #tpu.dot_dimension_numbers<[1], [0], [0], [1], [0, 0, 1, 1], [], []>} : vector<8x40xbf16>, vector<40x256xbf16>, vector<8x256xf32> -> vector<8x256xf32>
    %c0_3 = arith.constant 0 : index
    %c0_4 = arith.constant 0 : index
    %4 = vector.load %arg2[%c0_3, %c0_4] : memref<1x256xf32, #tpu.memory_space<vmem>>, vector<1x256xf32>
    %5 = vector.broadcast %4 : vector<1x256xf32> to vector<8x256xf32>
    %6 = arith.addf %3, %5 : vector<8x256xf32>
    %cst_5 = arith.constant 0.000000e+00 : f32
    %7 = vector.broadcast %cst_5 : f32 to vector<8x256xf32>
    %8 = arith.maximumf %6, %7 : vector<8x256xf32>
    %9 = arith.truncf %8 : vector<8x256xf32> to vector<8x256xbf16>
    %c0_6 = arith.constant 0 : index
    %c0_7 = arith.constant 0 : index
    %10 = vector.load %arg3[%c0_6, %c0_7] : memref<256x256xbf16, #tpu.memory_space<vmem>>, vector<256x256xbf16>
    %cst_8 = arith.constant dense<0.000000e+00> : vector<8x256xf32>
    %11 = tpu.matmul %9, %10, %cst_8 {dimension_numbers = #tpu.dot_dimension_numbers<[1], [0], [0], [1], [0, 0, 1, 1], [], []>} : vector<8x256xbf16>, vector<256x256xbf16>, vector<8x256xf32> -> vector<8x256xf32>
    %c0_9 = arith.constant 0 : index
    %c0_10 = arith.constant 0 : index
    %12 = vector.load %arg4[%c0_9, %c0_10] : memref<1x256xf32, #tpu.memory_space<vmem>>, vector<1x256xf32>
    %13 = vector.broadcast %12 : vector<1x256xf32> to vector<8x256xf32>
    %14 = arith.addf %11, %13 : vector<8x256xf32>
    %cst_11 = arith.constant 0.000000e+00 : f32
    %15 = vector.broadcast %cst_11 : f32 to vector<8x256xf32>
    %16 = arith.maximumf %14, %15 : vector<8x256xf32>
    %17 = arith.truncf %16 : vector<8x256xf32> to vector<8x256xbf16>
    %c0_12 = arith.constant 0 : index
    %c0_13 = arith.constant 0 : index
    %18 = vector.load %arg5[%c0_12, %c0_13] : memref<256x16xbf16, #tpu.memory_space<vmem>>, vector<256x16xbf16>
    %cst_14 = arith.constant dense<0.000000e+00> : vector<8x16xf32>
    %19 = tpu.matmul %17, %18, %cst_14 {dimension_numbers = #tpu.dot_dimension_numbers<[1], [0], [0], [1], [0, 0, 1, 1], [], []>} : vector<8x256xbf16>, vector<256x16xbf16>, vector<8x16xf32> -> vector<8x16xf32>
    %c0_15 = arith.constant 0 : index
    %c0_16 = arith.constant 0 : index
    %20 = vector.load %arg6[%c0_15, %c0_16] : memref<1x16xf32, #tpu.memory_space<vmem>>, vector<1x16xf32>
    %21 = vector.broadcast %20 : vector<1x16xf32> to vector<8x16xf32>
    %22 = arith.addf %19, %21 : vector<8x16xf32>
    %c0_17 = arith.constant 0 : index
    %c0_18 = arith.constant 0 : index
    %23 = vector.load %arg7[%c0_17, %c0_18] : memref<8x16xf32, #tpu.memory_space<vmem>>, vector<8x16xf32>
    tpu.vector_store %arg7[%c0_17, %c0_18], %22 {strides = array<i32>} : memref<8x16xf32, #tpu.memory_space<vmem>>, vector<8x16xf32>,
    return
  }
}

</mosaic_0001>

<llo_original>
// kernel: tpu_custom_call.1
$region0: #{tpu_custom_call.1}
  #allocation0 [shape = 'u32[]', space=smem, size = 0x4, offset = 0x4, fixed_abs, tag = 'smem constant byte address 0x4 - core index']
  #allocation1 [shape = 'u32[72,128]{1,0:T(1,128)}', space=vmem, size = 0x9000, scoped, tag = 'internal scratch']
  %s0 = inlined_call_operand.vmem [shape: f32[8,40], index: 0, kind: input, shape index: {}]
  %s1 = inlined_call_operand.vmem [shape: bf16[40,256], index: 1, kind: input, shape index: {}]
  %s2 = inlined_call_operand.vmem [shape: f32[1,256], index: 2, kind: input, shape index: {}]
  %s3 = inlined_call_operand.hbm [shape: bf16[256,256], index: 3, kind: input, shape index: {}]
  %s4 = inlined_call_operand.vmem [shape: f32[1,256], index: 4, kind: input, shape index: {}]
  %s5 = inlined_call_operand.vmem [shape: bf16[256,16], index: 5, kind: input, shape index: {}]
  %s6 = inlined_call_operand.vmem [shape: f32[1,16], index: 6, kind: input, shape index: {}]
  %s7 = inlined_call_operand.hbm [shape: f32[8,16], index: 7, kind: output, shape index: {}]
  %s8 = sld [smem:[#allocation0]]
  $region42: #{tpu_custom_call.1} parent=0
    _
  %s10 = ssub.s32 1, %s8
  %s11 = scalar_select 0, %s10, %s8
  $region1: #{tpu_custom_call.1} parent=0
    #allocation2 [shape = 'u8[131072]{0}', space=vmem, size = 0x20000, scoped, tag = 'input window, operand 3, single buffered']
    #allocation3 [shape = 's32[1]{0}', space=sflag, size = 0x4, scoped, tag = 'scoped memory for tpu_custom_call.1']
    #allocation4 [shape = 's32[1]{0}', space=sflag, size = 0x4, scoped, tag = 'scoped memory for tpu_custom_call.1']
    #allocation5 [shape = 'u8[4096]{0}', space=vmem, size = 0x1000, scoped, tag = 'output window, operand 0, single buffered']
    %12 = vsyncpa [#allocation3], 0
    %13 = vsyncpa [#allocation4], 0
    // Predicated region
    $region2: #{tpu_custom_call.1} parent=1 // pred_check
      _
    $region3: #{tpu_custom_call.1} parent=1 // pred_check_branch
      %15 = sbr.rel (0) target = $region5
    $region4: #{tpu_custom_call.1} parent=1 // pred_region
      _
    $region5: #{tpu_custom_call.1} parent=1 // pred_fallthru
      _
    // Predicated region
    $region6: #{tpu_custom_call.1} parent=1 // pred_check
      _
    $region7: #{tpu_custom_call.1} parent=1 // pred_check_branch
      %17 = sbr.rel (0) target = $region9
    $region8: #{tpu_custom_call.1} parent=1 // pred_region
      _
    $region9: #{tpu_custom_call.1} parent=1 // pred_fallthru
      _
    // Predicated region
    $region10: #{tpu_custom_call.1} parent=1 // pred_check
      _
    $region11: #{tpu_custom_call.1} parent=1 // pred_check_branch
      %19 = sbr.rel (0) target = $region13
    $region12: #{tpu_custom_call.1} parent=1 // pred_region
      _
    $region13: #{tpu_custom_call.1} parent=1 // pred_fallthru
      _
    // Predicated region
    $region14: #{tpu_custom_call.1} parent=1 // pred_check
      _
    $region15: #{tpu_custom_call.1} parent=1 // pred_check_branch
      %21 = sbr.rel (0) target = $region17
    $region16: #{tpu_custom_call.1} parent=1 // pred_region
      %23 = vsyncadd [#allocation3], 0
      %s24 = sshll.u32 %s3, 4
      %s25 = int_to_ptr.hbm [resolvable:$true] %s24
      %s26 = sshll.u32 [#allocation2], 4
      %s27 = int_to_ptr.vmem [resolvable:$true] %s26
      %32 = dma.hbm_to_vmem [thread:$0]  %s25, 4096, %s27, [#allocation3], 128, 128, 8
    $region17: #{tpu_custom_call.1} parent=1 // pred_fallthru
      _
    // Predicated region
    $region18: #{tpu_custom_call.1} parent=1 // pred_check
      _
    $region19: #{tpu_custom_call.1} parent=1 // pred_check_branch
      %34 = sbr.rel (0) target = $region21
    $region20: #{tpu_custom_call.1} parent=1 // pred_region
      _
    $region21: #{tpu_custom_call.1} parent=1 // pred_fallthru
      _
    // Predicated region
    $region22: #{tpu_custom_call.1} parent=1 // pred_check
      _
    $region23: #{tpu_custom_call.1} parent=1 // pred_check_branch
      %36 = sbr.rel (0) target = $region25
    $region24: #{tpu_custom_call.1} parent=1 // pred_region
      _
    $region25: #{tpu_custom_call.1} parent=1 // pred_fallthru
      _
    // Predicated region
    $region26: #{tpu_custom_call.1} parent=1 // pred_check
      _
    $region27: #{tpu_custom_call.1} parent=1 // pred_check_branch
      %38 = sbr.rel (0) target = $region29
    $region28: #{tpu_custom_call.1} parent=1 // pred_region
      _
    $region29: #{tpu_custom_call.1} parent=1 // pred_fallthru
      _
    // Predicated region
    $region30: #{tpu_custom_call.1} parent=1 // pred_check
      _
    $region31: #{tpu_custom_call.1} parent=1 // pred_check_branch
      %40 = sbr.rel (0) target = $region33
    $region32: #{tpu_custom_call.1} parent=1 // pred_region
      %42 = dma.done [#allocation3], 4096
    $region33: #{tpu_custom_call.1} parent=1 // pred_fallthru
      _
    %v44 = vld [vmem:[%s0] sm:$0xff]
    %v45 = vpack.c.bf16 %v44, %v44
    %v46 = vld [vmem:[%s1] sm:$0xff]
    %v47 = vld [vmem:[%s1 + $0x8] sm:$0xff]
    %v48 = vld [vmem:[%s1 + $0x10] sm:$0xff]
    %v49 = vld [vmem:[%s1 + $0x18] sm:$0xff]
    %v50 = vld [vmem:[%s1 + $0x20] sm:$0xff]
    %v51 = vld [vmem:[%s2] sm:$0x3]
    %v53 = vperm.slane %v51, 0
    %v54 = vperm.slane %v51, 1
    %v62 = vunpack.c.l.b16 %v46
    %v63 = vunpack.c.h.b16 %v46
    %v64 = vunpack.c.l.b16 %v47
    %v65 = vunpack.c.h.b16 %v47
    %v66 = vunpack.c.l.b16 %v48
    %v67 = vunpack.c.h.b16 %v48
    %v68 = vunpack.c.l.b16 %v49
    %v69 = vunpack.c.h.b16 %v49
    %v70 = vunpack.c.l.b16 %v50
    %v71 = vunpack.c.h.b16 %v50
    %v72 = vpack.c.b16 %v64, %v62
    %v73 = vpack.c.b16 %v65, %v63
    %v74 = vpack.c.b16 %v68, %v66
    %v75 = vpack.c.b16 %v69, %v67
    %v76 = vpack.c.b16 %v70, %v70
    %v77 = vpack.c.b16 %v71, %v71
    %vm82 = vcmask 326656
    %v84 = vsel %vm82, %v45, 0
    %vm86 = vcmask 1043456
    %v88 = vsel %vm86, %v76, 0
    %v91 = vsel %vm86, %v77, 0
    %93 = vmatpush.bf16.msra.mxu0 0
    %94 = vmatpush.bf16.msra.mxu0 0
    %95 = vmatpush.bf16.msra.mxu0 0
    %96 = vmatpush.bf16.msra.mxu0 0
    %97 = vmatpush.bf16.msra.mxu0 0
    %98 = vmatpush.bf16.msra.mxu0 %v88
    %99 = vmatpush.bf16.msra.mxu0 %v74
    %100 = vmatpush.bf16.msra.mxu0 %v72
    %101 = vmatmul.bf16.gmra.mxu0 %v84
    %v102 = vpop.f32.mrf.mxu0
    %v103 = vadd.f32 %v53, %v102
    %v104 = vpop.f32.mrf.mxu0
    %105 = vdwg.mxu0
    %106 = vmatpush.bf16.msra.mxu0 0
    %107 = vmatpush.bf16.msra.mxu0 0
    %108 = vmatpush.bf16.msra.mxu0 0
    %109 = vmatpush.bf16.msra.mxu0 0
    %110 = vmatpush.bf16.msra.mxu0 0
    %111 = vmatpush.bf16.msra.mxu0 %v91
    %112 = vmatpush.bf16.msra.mxu0 %v75
    %113 = vmatpush.bf16.msra.mxu0 %v73
    %114 = vmatmul.bf16.gmra.mxu0 %v84
    %v115 = vpop.f32.mrf.mxu0
    %v116 = vadd.f32 %v54, %v115
    %v117 = vpop.f32.mrf.mxu0
    %118 = vdwg.mxu0
    %v119 = vmax.f32 %v103, 0.0
    %v120 = vmax.f32 %v116, 0.0
    %v121 = vpack.c.bf16 %v119, %v119
    %v122 = vpack.c.bf16 %v120, %v120
    %v123 = vld [vmem:[#allocation2] sm:$0xff]
    %v124 = vld [vmem:[#allocation2 + $0x8] sm:$0xff]
    %v125 = vld [vmem:[#allocation2 + $0x10] sm:$0xff]
    %v126 = vld [vmem:[#allocation2 + $0x18] sm:$0xff]
    %v127 = vld [vmem:[#allocation2 + $0x20] sm:$0xff]
    %v128 = vld [vmem:[#allocation2 + $0x28] sm:$0xff]
    %v129 = vld [vmem:[#allocation2 + $0x30] sm:$0xff]
    %v130 = vld [vmem:[#allocation2 + $0x38] sm:$0xff]
    %v131 = vld [vmem:[#allocation2 + $0x40] sm:$0xff]
    %v132 = vld [vmem:[#allocation2 + $0x48] sm:$0xff]
    %v133 = vld [vmem:[#allocation2 + $0x50] sm:$0xff]
    %v134 = vld [vmem:[#allocation2 + $0x58] sm:$0xff]
    %v135 = vld [vmem:[#allocation2 + $0x60] sm:$0xff]
    %v136 = vld [vmem:[#allocation2 + $0x68] sm:$0xff]
    %v137 = vld [vmem:[#allocation2 + $0x70] sm:$0xff]
    %v138 = vld [vmem:[#allocation2 + $0x78] sm:$0xff]
    %v139 = vld [vmem:[#allocation2 + $0x80] sm:$0xff]
    %v140 = vld [vmem:[#allocation2 + $0x88] sm:$0xff]
    %v141 = vld [vmem:[#allocation2 + $0x90] sm:$0xff]
    %v142 = vld [vmem:[#allocation2 + $0x98] sm:$0xff]
    %v143 = vld [vmem:[#allocation2 + $0xa0] sm:$0xff]
    %v144 = vld [vmem:[#allocation2 + $0xa8] sm:$0xff]
    %v145 = vld [vmem:[#allocation2 + $0xb0] sm:$0xff]
    %v146 = vld [vmem:[#allocation2 + $0xb8] sm:$0xff]
    %v147 = vld [vmem:[#allocation2 + $0xc0] sm:$0xff]
    %v148 = vld [vmem:[#allocation2 + $0xc8] sm:$0xff]
    %v149 = vld [vmem:[#allocation2 + $0xd0] sm:$0xff]
    %v150 = vld [vmem:[#allocation2 + $0xd8] sm:$0xff]
    %v151 = vld [vmem:[#allocation2 + $0xe0] sm:$0xff]
    %v152 = vld [vmem:[#allocation2 + $0xe8] sm:$0xff]
    %v153 = vld [vmem:[#allocation2 + $0xf0] sm:$0xff]
    %v154 = vld [vmem:[#allocation2 + $0xf8] sm:$0xff]
    %v155 = vld [vmem:[%s4] sm:$0x3]
    %v157 = vperm.slane %v155, 0
    %v158 = vperm.slane %v155, 1
    %v193 = vunpack.c.l.b16 %v123
    %v194 = vunpack.c.h.b16 %v123
    %v195 = vunpack.c.l.b16 %v124
    %v196 = vunpack.c.h.b16 %v124
    %v197 = vunpack.c.l.b16 %v125
    %v198 = vunpack.c.h.b16 %v125
    %v199 = vunpack.c.l.b16 %v126
    %v200 = vunpack.c.h.b16 %v126
    %v201 = vunpack.c.l.b16 %v127
    %v202 = vunpack.c.h.b16 %v127
    %v203 = vunpack.c.l.b16 %v128
    %v204 = vunpack.c.h.b16 %v128
    %v205 = vunpack.c.l.b16 %v129
    %v206 = vunpack.c.h.b16 %v129
    %v207 = vunpack.c.l.b16 %v130
    %v208 = vunpack.c.h.b16 %v130
    %v209 = vunpack.c.l.b16 %v131
    %v210 = vunpack.c.h.b16 %v131
    %v211 = vunpack.c.l.b16 %v132
    %v212 = vunpack.c.h.b16 %v132
    %v213 = vunpack.c.l.b16 %v133
    %v214 = vunpack.c.h.b16 %v133
    %v215 = vunpack.c.l.b16 %v134
    %v216 = vunpack.c.h.b16 %v134
    %v217 = vunpack.c.l.b16 %v135
    %v218 = vunpack.c.h.b16 %v135
    %v219 = vunpack.c.l.b16 %v136
    %v220 = vunpack.c.h.b16 %v136
    %v221 = vunpack.c.l.b16 %v137
    %v222 = vunpack.c.h.b16 %v137
    %v223 = vunpack.c.l.b16 %v138
    %v224 = vunpack.c.h.b16 %v138
    %v225 = vunpack.c.l.b16 %v139
    %v226 = vunpack.c.h.b16 %v139
    %v227 = vunpack.c.l.b16 %v140
    %v228 = vunpack.c.h.b16 %v140
    %v229 = vunpack.c.l.b16 %v141
    %v230 = vunpack.c.h.b16 %v141
    %v231 = vunpack.c.l.b16 %v142
    %v232 = vunpack.c.h.b16 %v142
    %v233 = vunpack.c.l.b16 %v143
    %v234 = vunpack.c.h.b16 %v143
    %v235 = vunpack.c.l.b16 %v144
    %v236 = vunpack.c.h.b16 %v144
    %v237 = vunpack.c.l.b16 %v145
    %v238 = vunpack.c.h.b16 %v145
    %v239 = vunpack.c.l.b16 %v146
    %v240 = vunpack.c.h.b16 %v146
    %v241 = vunpack.c.l.b16 %v147
    %v242 = vunpack.c.h.b16 %v147
    %v243 = vunpack.c.l.b16 %v148
    %v244 = vunpack.c.h.b16 %v148
    %v245 = vunpack.c.l.b16 %v149
    %v246 = vunpack.c.h.b16 %v149
    %v247 = vunpack.c.l.b16 %v150
    %v248 = vunpack.c.h.b16 %v150
    %v249 = vunpack.c.l.b16 %v151
    %v250 = vunpack.c.h.b16 %v151
    %v251 = vunpack.c.l.b16 %v152
    %v252 = vunpack.c.h.b16 %v152
    %v253 = vunpack.c.l.b16 %v153
    %v254 = vunpack.c.h.b16 %v153
    %v255 = vunpack.c.l.b16 %v154
    %v256 = vunpack.c.h.b16 %v154
    %v257 = vpack.c.b16 %v195, %v193
    %v258 = vpack.c.b16 %v196, %v194
    %v259 = vpack.c.b16 %v199, %v197
    %v260 = vpack.c.b16 %v200, %v198
    %v261 = vpack.c.b16 %v203, %v201
    %v262 = vpack.c.b16 %v204, %v202
    %v263 = vpack.c.b16 %v207, %v205
    %v264 = vpack.c.b16 %v208, %v206
    %v265 = vpack.c.b16 %v211, %v209
    %v266 = vpack.c.b16 %v212, %v210
    %v267 = vpack.c.b16 %v215, %v213
    %v268 = vpack.c.b16 %v216, %v214
    %v269 = vpack.c.b16 %v219, %v217
    %v270 = vpack.c.b16 %v220, %v218
    %v271 = vpack.c.b16 %v223, %v221
    %v272 = vpack.c.b16 %v224, %v222
    %v273 = vpack.c.b16 %v227, %v225
    %v274 = vpack.c.b16 %v228, %v226
    %v275 = vpack.c.b16 %v231, %v229
    %v276 = vpack.c.b16 %v232, %v230
    %v277 = vpack.c.b16 %v235, %v233
    %v278 = vpack.c.b16 %v236, %v234
    %v279 = vpack.c.b16 %v239, %v237
    %v280 = vpack.c.b16 %v240, %v238
    %v281 = vpack.c.b16 %v243, %v241
    %v282 = vpack.c.b16 %v244, %v242
    %v283 = vpack.c.b16 %v247, %v245
    %v284 = vpack.c.b16 %v248, %v246
    %v285 = vpack.c.b16 %v251, %v249
    %v286 = vpack.c.b16 %v252, %v250
    %v287 = vpack.c.b16 %v255, %v253
    %v288 = vpack.c.b16 %v256, %v254
    %321 = vmatpush.bf16.msra.mxu0 %v271
    %322 = vmatpush.bf16.msra.mxu0 %v269
    %323 = vmatpush.bf16.msra.mxu0 %v267
    %324 = vmatpush.bf16.msra.mxu0 %v265
    %325 = vmatpush.bf16.msra.mxu0 %v263
    %326 = vmatpush.bf16.msra.mxu0 %v261
    %327 = vmatpush.bf16.msra.mxu0 %v259
    %328 = vmatpush.bf16.msra.mxu0 %v257
    %329 = vmatmul.bf16.gmra.mxu0 %v121
    %v330 = vpop.f32.mrf.mxu0
    %v331 = vadd.f32 %v157, %v330
    %v332 = vpop.f32.mrf.mxu0
    %333 = vdwg.mxu0
    %334 = vmatpush.bf16.msra.mxu0 %v287
    %335 = vmatpush.bf16.msra.mxu0 %v285
    %336 = vmatpush.bf16.msra.mxu0 %v283
    %337 = vmatpush.bf16.msra.mxu0 %v281
    %338 = vmatpush.bf16.msra.mxu0 %v279
    %339 = vmatpush.bf16.msra.mxu0 %v277
    %340 = vmatpush.bf16.msra.mxu0 %v275
    %341 = vmatpush.bf16.msra.mxu0 %v273
    %342 = vmatmul.bf16.gmra.mxu0 %v122
    %v343 = vpop.f32.mrf.mxu0
    %v344 = vadd.f32 %v331, %v343
    %v345 = vpop.f32.mrf.mxu0
    %346 = vdwg.mxu0
    %347 = vmatpush.bf16.msra.mxu0 %v272
    %348 = vmatpush.bf16.msra.mxu0 %v270
    %349 = vmatpush.bf16.msra.mxu0 %v268
    %350 = vmatpush.bf16.msra.mxu0 %v266
    %351 = vmatpush.bf16.msra.mxu0 %v264
    %352 = vmatpush.bf16.msra.mxu0 %v262
    %353 = vmatpush.bf16.msra.mxu0 %v260
    %354 = vmatpush.bf16.msra.mxu0 %v258
    %355 = vmatmul.bf16.gmra.mxu0 %v121
    %v356 = vpop.f32.mrf.mxu0
    %v357 = vadd.f32 %v158, %v356
    %v358 = vpop.f32.mrf.mxu0
    %359 = vdwg.mxu0
    %360 = vmatpush.bf16.msra.mxu0 %v288
    %361 = vmatpush.bf16.msra.mxu0 %v286
    %362 = vmatpush.bf16.msra.mxu0 %v284
    %363 = vmatpush.bf16.msra.mxu0 %v282
    %364 = vmatpush.bf16.msra.mxu0 %v280
    %365 = vmatpush.bf16.msra.mxu0 %v278
    %366 = vmatpush.bf16.msra.mxu0 %v276
    %367 = vmatpush.bf16.msra.mxu0 %v274
    %368 = vmatmul.bf16.gmra.mxu0 %v122
    %v369 = vpop.f32.mrf.mxu0
    %v370 = vadd.f32 %v357, %v369
    %v371 = vpop.f32.mrf.mxu0
    %372 = vdwg.mxu0
    %v373 = vmax.f32 %v344, 0.0
    %v374 = vmax.f32 %v370, 0.0
    %v375 = vpack.c.bf16 %v373, %v373
    %v376 = vpack.c.bf16 %v374, %v374
    %v377 = vld [vmem:[%s5] sm:$0xf]
    %v378 = vld [vmem:[%s5 + $0x4] sm:$0xf]
    %v379 = vld [vmem:[%s5 + $0x8] sm:$0xf]
    %v380 = vld [vmem:[%s5 + $0xc] sm:$0xf]
    %v381 = vld [vmem:[%s5 + $0x10] sm:$0xf]
    %v382 = vld [vmem:[%s5 + $0x14] sm:$0xf]
    %v383 = vld [vmem:[%s5 + $0x18] sm:$0xf]
    %v384 = vld [vmem:[%s5 + $0x1c] sm:$0xf]
    %v385 = vld [vmem:[%s5 + $0x20] sm:$0xf]
    %v386 = vld [vmem:[%s5 + $0x24] sm:$0xf]
    %v387 = vld [vmem:[%s5 + $0x28] sm:$0xf]
    %v388 = vld [vmem:[%s5 + $0x2c] sm:$0xf]
    %v389 = vld [vmem:[%s5 + $0x30] sm:$0xf]
    %v390 = vld [vmem:[%s5 + $0x34] sm:$0xf]
    %v391 = vld [vmem:[%s5 + $0x38] sm:$0xf]
    %v392 = vld [vmem:[%s5 + $0x3c] sm:$0xf]
    %v393 = vld [vmem:[%s5 + $0x40] sm:$0xf]
    %v394 = vld [vmem:[%s5 + $0x44] sm:$0xf]
    %v395 = vld [vmem:[%s5 + $0x48] sm:$0xf]
    %v396 = vld [vmem:[%s5 + $0x4c] sm:$0xf]
    %v397 = vld [vmem:[%s5 + $0x50] sm:$0xf]
    %v398 = vld [vmem:[%s5 + $0x54] sm:$0xf]
    %v399 = vld [vmem:[%s5 + $0x58] sm:$0xf]
    %v400 = vld [vmem:[%s5 + $0x5c] sm:$0xf]
    %v401 = vld [vmem:[%s5 + $0x60] sm:$0xf]
    %v402 = vld [vmem:[%s5 + $0x64] sm:$0xf]
    %v403 = vld [vmem:[%s5 + $0x68] sm:$0xf]
    %v404 = vld [vmem:[%s5 + $0x6c] sm:$0xf]
    %v405 = vld [vmem:[%s5 + $0x70] sm:$0xf]
    %v406 = vld [vmem:[%s5 + $0x74] sm:$0xf]
    %v407 = vld [vmem:[%s5 + $0x78] sm:$0xf]
    %v408 = vld [vmem:[%s5 + $0x7c] sm:$0xf]
    %v409 = vld [vmem:[%s6] sm:$0x1]
    %v411 = vperm.slane %v409, 0
    %v445 = vunpack.c.l.b16 %v377
    %v446 = vunpack.c.l.b16 %v378
    %v447 = vunpack.c.l.b16 %v379
    %v448 = vunpack.c.l.b16 %v380
    %v449 = vunpack.c.l.b16 %v381
    %v450 = vunpack.c.l.b16 %v382
    %v451 = vunpack.c.l.b16 %v383
    %v452 = vunpack.c.l.b16 %v384
    %v453 = vunpack.c.l.b16 %v385
    %v454 = vunpack.c.l.b16 %v386
    %v455 = vunpack.c.l.b16 %v387
    %v456 = vunpack.c.l.b16 %v388
    %v457 = vunpack.c.l.b16 %v389
    %v458 = vunpack.c.l.b16 %v390
    %v459 = vunpack.c.l.b16 %v391
    %v460 = vunpack.c.l.b16 %v392
    %v461 = vunpack.c.l.b16 %v393
    %v462 = vunpack.c.l.b16 %v394
    %v463 = vunpack.c.l.b16 %v395
    %v464 = vunpack.c.l.b16 %v396
    %v465 = vunpack.c.l.b16 %v397
    %v466 = vunpack.c.l.b16 %v398
    %v467 = vunpack.c.l.b16 %v399
    %v468 = vunpack.c.l.b16 %v400
    %v469 = vunpack.c.l.b16 %v401
    %v470 = vunpack.c.l.b16 %v402
    %v471 = vunpack.c.l.b16 %v403
    %v472 = vunpack.c.l.b16 %v404
    %v473 = vunpack.c.l.b16 %v405
    %v474 = vunpack.c.l.b16 %v406
    %v475 = vunpack.c.l.b16 %v407
    %v476 = vunpack.c.l.b16 %v408
    %v477 = vpack.c.b16 %v446, %v445
    %v478 = vpack.c.b16 %v448, %v447
    %v479 = vpack.c.b16 %v450, %v449
    %v480 = vpack.c.b16 %v452, %v451
    %v481 = vpack.c.b16 %v454, %v453
    %v482 = vpack.c.b16 %v456, %v455
    %v483 = vpack.c.b16 %v458, %v457
    %v484 = vpack.c.b16 %v460, %v459
    %v485 = vpack.c.b16 %v462, %v461
    %v486 = vpack.c.b16 %v464, %v463
    %v487 = vpack.c.b16 %v466, %v465
    %v488 = vpack.c.b16 %v468, %v467
    %v489 = vpack.c.b16 %v470, %v469
    %v490 = vpack.c.b16 %v472, %v471
    %v491 = vpack.c.b16 %v474, %v473
    %v492 = vpack.c.b16 %v476, %v475
    %509 = vmatpush.bf16.msra.mxu0 %v484
    %510 = vmatpush.bf16.msra.mxu0 %v483
    %511 = vmatpush.bf16.msra.mxu0 %v482
    %512 = vmatpush.bf16.msra.mxu0 %v481
    %513 = vmatpush.bf16.msra.mxu0 %v480
    %514 = vmatpush.bf16.msra.mxu0 %v479
    %515 = vmatpush.bf16.msra.mxu0 %v478
    %516 = vmatpush.bf16.msra.mxu0 %v477
    %517 = vmatmul.bf16.gmra.mxu0 %v375
    %v518 = vpop.f32.mrf.mxu0
    %v519 = vadd.f32 %v411, %v518
    %v520 = vpop.f32.mrf.mxu0
    %521 = vdwg.mxu0
    %522 = vmatpush.bf16.msra.mxu0 %v492
    %523 = vmatpush.bf16.msra.mxu0 %v491
    %524 = vmatpush.bf16.msra.mxu0 %v490
    %525 = vmatpush.bf16.msra.mxu0 %v489
    %526 = vmatpush.bf16.msra.mxu0 %v488
    %527 = vmatpush.bf16.msra.mxu0 %v487
    %528 = vmatpush.bf16.msra.mxu0 %v486
    %529 = vmatpush.bf16.msra.mxu0 %v485
    %530 = vmatmul.bf16.gmra.mxu0 %v376
    %v531 = vpop.f32.mrf.mxu0
    %v532 = vadd.f32 %v519, %v531
    %v533 = vpop.f32.mrf.mxu0
    %534 = vdwg.mxu0
    %vm535 = vcmask 130048
    %536 = vst.msk [vmem:[#allocation5] sm:$0xff] %vm535, %v532
    // Predicated region
    $region34: #{tpu_custom_call.1} parent=1 // pred_check
      _
    $region35: #{tpu_custom_call.1} parent=1 // pred_check_branch
      %538 = sbr.rel (0) target = $region37
    $region36: #{tpu_custom_call.1} parent=1 // pred_region
      %540 = vsyncadd [#allocation4], 0
      %s542 = sshll.u32 [#allocation5], 4
      %s543 = int_to_ptr.vmem [resolvable:$true] %s542
      %s544 = sshll.u32 %s7, 4
      %s545 = int_to_ptr.hbm [resolvable:$true] %s544
      %547 = dma.vmem_to_hbm [thread:$0]  %s543, 128, %s545, [#allocation4]
    $region37: #{tpu_custom_call.1} parent=1 // pred_fallthru
      _
    // Predicated region
    $region38: #{tpu_custom_call.1} parent=1 // pred_check
      _
    $region39: #{tpu_custom_call.1} parent=1 // pred_check_branch
      %549 = sbr.rel (0) target = $region41
    $region40: #{tpu_custom_call.1} parent=1 // pred_region
      %551 = dma.done [#allocation4], 128
    $region41: #{tpu_custom_call.1} parent=1 // pred_fallthru
      _
    %552 = vsyncpa [#allocation3], 1
    %553 = vsyncpa [#allocation4], 1

</llo_original>
